<compile_context>
chip_gen: v6e
topology: v6e:2x2x1
jax: 0.10.0
libtpu: 0.0.40
codegen_flags: <defaults>
</compile_context>

<pallas_src>
import jax
import jax.numpy as jnp
from jax.experimental import pallas as pl
from jax.experimental.pallas import tpu as pltpu

_LANE = 128


def _ceil_to(n, m):
    return ((n + m - 1) // m) * m


def _pad_axis(x, axis, target):
    pad = target - x.shape[axis]
    if pad == 0:
        return x
    widths = [(0, 0)] * x.ndim
    widths[axis] = (0, pad)
    return jnp.pad(x, widths)


# --------------------- single-step kernel (module forward) ------------------

def _elman_step_kernel(x_ref, c_ref, w1x_ref, w1c_ref, w2_ref, out_ref, ctx_ref):
    # h = tanh(x @ w1_x + c @ w1_c)   -- concat-free K-split of w1
    pre = jnp.dot(x_ref[...], w1x_ref[...], preferred_element_type=jnp.float32)
    pre = pre + jnp.dot(c_ref[...], w1c_ref[...],
                        preferred_element_type=jnp.float32)
    h = jnp.tanh(pre)
    ctx_ref[...] = h.astype(ctx_ref.dtype)
    out_ref[...] = jnp.dot(h, w2_ref[...],
                           preferred_element_type=jnp.float32
                           ).astype(out_ref.dtype)


def elman_rnn_forward(x, context_state, w1, w2):
    """One Elman step. Returns (out, new_context_state); matches the PyTorch
    module's forward exactly (up to f32 accumulation order)."""
    B, F = x.shape
    _, H = context_state.shape
    FH, H1 = w1.shape
    H2, O = w2.shape
    assert FH == F + H and H1 == H and H2 == H

    Hp = _ceil_to(H, _LANE)
    Op = _ceil_to(O, _LANE)

    # K-split of w1 + lane-dense zero padding (padded rows/cols are zero, so
    # the valid slice of every result is unchanged).
    w1x = _pad_axis(w1[:F], 1, Hp)                       # (F, Hp)
    w1c = _pad_axis(_pad_axis(w1[F:], 1, Hp), 0, Hp)     # (Hp, Hp)
    w2p = _pad_axis(_pad_axis(w2, 1, Op), 0, Hp)         # (Hp, Op)
    cp = _pad_axis(context_state, 1, Hp)                 # (B, Hp)

    vmem = pl.BlockSpec(memory_space=pltpu.MemorySpace.VMEM)
    out_p, ctx_p = pl.pallas_call(
        _elman_step_kernel,
        out_shape=(jax.ShapeDtypeStruct((B, Op), x.dtype),
                   jax.ShapeDtypeStruct((B, Hp), x.dtype)),
        in_specs=[vmem, vmem, vmem, vmem, vmem],
        out_specs=(vmem, vmem),
    )(x, cp, w1x, w1c, w2p)
    return out_p[:, :O], ctx_p[:, :H]


# --------------------- fused multi-step kernel (grid over time) -------------

def _elman_seq_kernel(x_ref, c0_ref, w1x_ref, w1c_ref, w2_ref,
                      out_ref, ctxf_ref, ctx_sc):
    t = pl.program_id(0)

    @pl.when(t == 0)
    def _():
        ctx_sc[...] = c0_ref[...].astype(ctx_sc.dtype)

    pre = jnp.dot(x_ref[0], w1x_ref[...], preferred_element_type=jnp.float32)
    pre = pre + jnp.dot(ctx_sc[...], w1c_ref[...],
                        preferred_element_type=jnp.float32)
    h = jnp.tanh(pre)
    ctx_sc[...] = h
    out_ref[0] = jnp.dot(h, w2_ref[...],
                         preferred_element_type=jnp.float32
                         ).astype(out_ref.dtype)
    # Final-context output block is resident (same block index every step);
    # rewriting it each step is a single vreg store and keeps it correct.
    ctxf_ref[...] = h.astype(ctxf_ref.dtype)


def elman_rnn_sequence(x_seq, context_state, w1, w2):
    """Run T Elman steps in ONE pallas_call.

    x_seq: (T, B, F). Returns (out_seq (T, B, O), final context (B, H)).
    Weights and the hidden state stay resident in VMEM across all T steps.
    """
    T, B, F = x_seq.shape
    _, H = context_state.shape
    FH, H1 = w1.shape
    H2, O = w2.shape
    assert FH == F + H and H1 == H and H2 == H

    Hp = _ceil_to(H, _LANE)
    Op = _ceil_to(O, _LANE)

    w1x = _pad_axis(w1[:F], 1, Hp)                       # (F, Hp)
    w1c = _pad_axis(_pad_axis(w1[F:], 1, Hp), 0, Hp)     # (Hp, Hp)
    w2p = _pad_axis(_pad_axis(w2, 1, Op), 0, Hp)         # (Hp, Op)
    cp = _pad_axis(context_state, 1, Hp)                 # (B, Hp)

    flops = 2 * T * B * (F * Hp + Hp * Hp + Hp * Op)
    bytes_accessed = 4 * (x_seq.size + cp.size + w1x.size + w1c.size
                          + w2p.size + T * B * Op + B * Hp)

    out_p, ctx_p = pl.pallas_call(
        _elman_seq_kernel,
        out_shape=(jax.ShapeDtypeStruct((T, B, Op), x_seq.dtype),
                   jax.ShapeDtypeStruct((B, Hp), x_seq.dtype)),
        grid=(T,),
        in_specs=[
            pl.BlockSpec((1, B, F), lambda t: (t, 0, 0)),   # x[t]  (pipelined)
            pl.BlockSpec((B, Hp), lambda t: (0, 0)),        # ctx0  (resident)
            pl.BlockSpec((F, Hp), lambda t: (0, 0)),        # w1_x  (resident)
            pl.BlockSpec((Hp, Hp), lambda t: (0, 0)),       # w1_c  (resident)
            pl.BlockSpec((Hp, Op), lambda t: (0, 0)),       # w2    (resident)
        ],
        out_specs=(
            pl.BlockSpec((1, B, Op), lambda t: (t, 0, 0)),  # out[t]
            pl.BlockSpec((B, Hp), lambda t: (0, 0)),        # final context
        ),
        scratch_shapes=[pltpu.VMEM((B, Hp), jnp.float32)],  # carried state
        compiler_params=pltpu.CompilerParams(
            dimension_semantics=("arbitrary",)),            # time is serial
        cost_estimate=pl.CostEstimate(flops=flops,
                                      transcendentals=T * B * Hp,
                                      bytes_accessed=bytes_accessed),
    )(x_seq, cp, w1x, w1c, w2p)
    return out_p[:, :, :O], ctx_p[:, :H]


# --------------------------------- reference --------------------------------

def elman_rnn_reference(x, context_state, w1, w2):
    xh = jnp.concatenate([x, context_state], axis=1)
    ctx = jnp.tanh(xh @ w1)
    out = ctx @ w2
    return out, ctx


if __name__ == "__main__":
    # feature F = 16, hidden H = 32 (=> input_size = 48), output O = 16,
    # batch B = 8, sequence length T = 8.
    B, F, H, O, T = 8, 16, 32, 16, 8
    key = jax.random.PRNGKey(0)
    k_x, k_seq, k_w1, k_w2 = jax.random.split(key, 4)

    x = jax.random.normal(k_x, (B, F), dtype=jnp.float32)
    x_seq = jax.random.normal(k_seq, (T, B, F), dtype=jnp.float32)
    ctx0 = jnp.zeros((B, H), dtype=jnp.float32)

    # init.normal_(w1, 0.0, 0.4), init.normal_(w2, 0.0, 0.3)
    w1 = 0.4 * jax.random.normal(k_w1, (F + H, H), dtype=jnp.float32)
    w2 = 0.3 * jax.random.normal(k_w2, (H, O), dtype=jnp.float32)

    # --- single step (exact module semantics) ---
    out, new_ctx = elman_rnn_forward(x, ctx0, w1, w2)
    out = jax.block_until_ready(out)
    new_ctx = jax.block_until_ready(new_ctx)
    ref_out, ref_ctx = elman_rnn_reference(x, ctx0, w1, w2)
    assert out.shape == (B, O) and new_ctx.shape == (B, H)
    assert jnp.allclose(out, ref_out, atol=1e-5, rtol=1e-5)
    assert jnp.allclose(new_ctx, ref_ctx, atol=1e-5, rtol=1e-5)

    # --- fused T-step sequence (one pallas_call) ---
    out_seq, ctx_T = elman_rnn_sequence(x_seq, ctx0, w1, w2)
    out_seq = jax.block_until_ready(out_seq)
    ctx_T = jax.block_until_ready(ctx_T)

    ref_outs = []
    c = ctx0
    for t in range(T):
        o, c = elman_rnn_reference(x_seq[t], c, w1, w2)
        ref_outs.append(o)
    ref_out_seq = jnp.stack(ref_outs, axis=0)
    assert out_seq.shape == (T, B, O) and ctx_T.shape == (B, H)
    assert jnp.allclose(out_seq, ref_out_seq, atol=1e-5, rtol=1e-5)
    assert jnp.allclose(ctx_T, c, atol=1e-5, rtol=1e-5)

    print("KERNEL_OK")
</pallas_src>

<mosaic_0001>
module attributes {stable_mosaic.version = 11 : i64} {
  func.func @_elman_step_kernel(%arg0: memref<8x16xf32, #tpu.memory_space<vmem>>, %arg1: memref<8x128xf32, #tpu.memory_space<vmem>>, %arg2: memref<16x128xf32, #tpu.memory_space<vmem>>, %arg3: memref<128x128xf32, #tpu.memory_space<vmem>>, %arg4: memref<128x128xf32, #tpu.memory_space<vmem>>, %arg5: memref<8x128xf32, #tpu.memory_space<vmem>>, %arg6: memref<8x128xf32, #tpu.memory_space<vmem>>) attributes {dimension_semantics = [], scalar_prefetch = 0 : i64, scratch_operands = 0 : i64, tpu.core_type = #tpu.core_type<tc>} {
    %c0 = arith.constant 0 : index
    %c0_0 = arith.constant 0 : index
    %0 = vector.load %arg0[%c0, %c0_0] : memref<8x16xf32, #tpu.memory_space<vmem>>, vector<8x16xf32>
    %c0_1 = arith.constant 0 : index
    %c0_2 = arith.constant 0 : index
    %1 = vector.load %arg2[%c0_1, %c0_2] : memref<16x128xf32, #tpu.memory_space<vmem>>, vector<16x128xf32>
    %cst = arith.constant dense<0.000000e+00> : vector<8x128xf32>
    %2 = tpu.matmul %0, %1, %cst {dimension_numbers = #tpu.dot_dimension_numbers<[1], [0], [0], [1], [0, 0, 1, 1], [], []>} : vector<8x16xf32>, vector<16x128xf32>, vector<8x128xf32> -> vector<8x128xf32>
    %c0_3 = arith.constant 0 : index
    %c0_4 = arith.constant 0 : index
    %3 = vector.load %arg1[%c0_3, %c0_4] : memref<8x128xf32, #tpu.memory_space<vmem>>, vector<8x128xf32>
    %c0_5 = arith.constant 0 : index
    %c0_6 = arith.constant 0 : index
    %4 = vector.load %arg3[%c0_5, %c0_6] : memref<128x128xf32, #tpu.memory_space<vmem>>, vector<128x128xf32>
    %cst_7 = arith.constant dense<0.000000e+00> : vector<8x128xf32>
    %5 = tpu.matmul %3, %4, %cst_7 {dimension_numbers = #tpu.dot_dimension_numbers<[1], [0], [0], [1], [0, 0, 1, 1], [], []>} : vector<8x128xf32>, vector<128x128xf32>, vector<8x128xf32> -> vector<8x128xf32>
    %6 = arith.addf %2, %5 : vector<8x128xf32>
    %7 = math.tanh %6 : vector<8x128xf32>
    %c0_8 = arith.constant 0 : index
    %c0_9 = arith.constant 0 : index
    %8 = vector.load %arg6[%c0_8, %c0_9] : memref<8x128xf32, #tpu.memory_space<vmem>>, vector<8x128xf32>
    tpu.vector_store %arg6[%c0_8, %c0_9], %7 {strides = array<i32>} : memref<8x128xf32, #tpu.memory_space<vmem>>, vector<8x128xf32>,
    %c0_10 = arith.constant 0 : index
    %c0_11 = arith.constant 0 : index
    %9 = vector.load %arg4[%c0_10, %c0_11] : memref<128x128xf32, #tpu.memory_space<vmem>>, vector<128x128xf32>
    %cst_12 = arith.constant dense<0.000000e+00> : vector<8x128xf32>
    %10 = tpu.matmul %7, %9, %cst_12 {dimension_numbers = #tpu.dot_dimension_numbers<[1], [0], [0], [1], [0, 0, 1, 1], [], []>} : vector<8x128xf32>, vector<128x128xf32>, vector<8x128xf32> -> vector<8x128xf32>
    %c0_13 = arith.constant 0 : index
    %c0_14 = arith.constant 0 : index
    %11 = vector.load %arg5[%c0_13, %c0_14] : memref<8x128xf32, #tpu.memory_space<vmem>>, vector<8x128xf32>
    tpu.vector_store %arg5[%c0_13, %c0_14], %10 {strides = array<i32>} : memref<8x128xf32, #tpu.memory_space<vmem>>, vector<8x128xf32>,
    return
  }
}

</mosaic_0001>

<llo_original>
// kernel: tpu_custom_call.1
$region0: #{tpu_custom_call.1}
  #allocation0 [shape = 'u32[]', space=smem, size = 0x4, offset = 0x4, fixed_abs, tag = 'smem constant byte address 0x4 - core index']
  #allocation1 [shape = 'u32[144,128]{1,0:T(1,128)}', space=vmem, size = 0x12000, scoped, tag = 'internal scratch']
  %s0 = inlined_call_operand.hbm [shape: f32[8,16], index: 0, kind: input, shape index: {}]
  %s1 = inlined_call_operand.hbm [shape: f32[8,128], index: 1, kind: input, shape index: {}]
  %s2 = inlined_call_operand.hbm [shape: f32[16,128], index: 2, kind: input, shape index: {}]
  %s3 = inlined_call_operand.hbm [shape: f32[128,128], index: 3, kind: input, shape index: {}]
  %s4 = inlined_call_operand.hbm [shape: f32[128,128], index: 4, kind: input, shape index: {}]
  %s5 = inlined_call_operand.hbm [shape: f32[8,128], index: 5, kind: output, shape index: {0}]
  %s6 = inlined_call_operand.hbm [shape: f32[8,128], index: 6, kind: output, shape index: {1}]
  %7 = xla_tuple %s5, %s6
  %s8 = sld [smem:[#allocation0]]
  $region58: #{tpu_custom_call.1} parent=0
    _
  %s10 = ssub.s32 1, %s8
  %s11 = scalar_select 0, %s10, %s8
  $region1: #{tpu_custom_call.1} parent=0
    #allocation2 [shape = 'u8[4096]{0}', space=vmem, size = 0x1000, scoped, tag = 'input window, operand 0, single buffered']
    #allocation3 [shape = 's32[1]{0}', space=sflag, size = 0x4, scoped, tag = 'scoped memory for tpu_custom_call.1']
    #allocation4 [shape = 's32[1]{0}', space=sflag, size = 0x4, scoped, tag = 'scoped memory for tpu_custom_call.1']
    #allocation5 [shape = 'u8[4096]{0}', space=vmem, size = 0x1000, scoped, tag = 'input window, operand 1, single buffered']
    #allocation6 [shape = 's32[1]{0}', space=sflag, size = 0x4, scoped, tag = 'scoped memory for tpu_custom_call.1']
    #allocation7 [shape = 'u8[8192]{0}', space=vmem, size = 0x2000, scoped, tag = 'input window, operand 2, single buffered']
    #allocation8 [shape = 'u8[65536]{0}', space=vmem, size = 0x10000, scoped, tag = 'input window, operand 3, single buffered']
    #allocation9 [shape = 's32[1]{0}', space=sflag, size = 0x4, scoped, tag = 'scoped memory for tpu_custom_call.1']
    #allocation10 [shape = 'u8[65536]{0}', space=vmem, size = 0x10000, scoped, tag = 'input window, operand 4, single buffered']
    #allocation11 [shape = 'u8[4096]{0}', space=vmem, size = 0x1000, scoped, tag = 'output window, operand 0, single buffered']
    #allocation12 [shape = 'u8[4096]{0}', space=vmem, size = 0x1000, scoped, tag = 'output window, operand 1, single buffered']
    #allocation13 [shape = 's32[1]{0}', space=sflag, size = 0x4, scoped, tag = 'scoped memory for tpu_custom_call.1']
    %12 = vsyncpa [#allocation3], 0
    %13 = vsyncpa [#allocation6], 0
    %14 = vsyncpa [#allocation9], 0
    %15 = vsyncpa [#allocation4], 0
    %16 = vsyncpa [#allocation13], 0
    // Predicated region
    $region2: #{tpu_custom_call.1} parent=1 // pred_check
      _
    $region3: #{tpu_custom_call.1} parent=1 // pred_check_branch
      %18 = sbr.rel (0) target = $region5
    $region4: #{tpu_custom_call.1} parent=1 // pred_region
      %s20 = ssub.s32 128, 128
      %21 = vsyncadd [#allocation3], %s20
      %s23 = sshll.u32 [#allocation2], 4
      %s24 = int_to_ptr.vmem [resolvable:$true] %s23
      %26 = dma.hbm_to_vmem [thread:$0]  %s0, 128, %s24, [#allocation3]
    $region5: #{tpu_custom_call.1} parent=1 // pred_fallthru
      _
    // Predicated region
    $region6: #{tpu_custom_call.1} parent=1 // pred_check
      _
    $region7: #{tpu_custom_call.1} parent=1 // pred_check_branch
      %28 = sbr.rel (0) target = $region9
    $region8: #{tpu_custom_call.1} parent=1 // pred_region
      %s30 = ssub.s32 128, 128
      %31 = vsyncadd [#allocation6], %s30
      %s33 = sshll.u32 [#allocation5], 4
      %s34 = int_to_ptr.vmem [resolvable:$true] %s33
      %36 = dma.hbm_to_vmem [thread:$0]  %s1, 128, %s34, [#allocation6]
    $region9: #{tpu_custom_call.1} parent=1 // pred_fallthru
      _
    // Predicated region
    $region10: #{tpu_custom_call.1} parent=1 // pred_check
      _
    $region11: #{tpu_custom_call.1} parent=1 // pred_check_branch
      %38 = sbr.rel (0) target = $region13
    $region12: #{tpu_custom_call.1} parent=1 // pred_region
      %s40 = ssub.s32 256, 256
      %41 = vsyncadd [#allocation6], %s40
      %s42 = sshll.u32 [#allocation7], 4
      %s43 = int_to_ptr.vmem [resolvable:$true] %s42
      %48 = dma.hbm_to_vmem [thread:$0]  %s2, 256, %s43, [#allocation6], 128, 128, 8
    $region13: #{tpu_custom_call.1} parent=1 // pred_fallthru
      _
    // Predicated region
    $region14: #{tpu_custom_call.1} parent=1 // pred_check
      _
    $region15: #{tpu_custom_call.1} parent=1 // pred_check_branch
      %50 = sbr.rel (0) target = $region17
    $region16: #{tpu_custom_call.1} parent=1 // pred_region
      %s52 = ssub.s32 2048, 2048
      %53 = vsyncadd [#allocation9], %s52
      %s54 = sshll.u32 [#allocation8], 4
      %s55 = int_to_ptr.vmem [resolvable:$true] %s54
      %60 = dma.hbm_to_vmem [thread:$0]  %s3, 2048, %s55, [#allocation9], 128, 128, 8
    $region17: #{tpu_custom_call.1} parent=1 // pred_fallthru
      _
    // Predicated region
    $region18: #{tpu_custom_call.1} parent=1 // pred_check
      _
    $region19: #{tpu_custom_call.1} parent=1 // pred_check_branch
      %62 = sbr.rel (0) target = $region21
    $region20: #{tpu_custom_call.1} parent=1 // pred_region
      %s64 = ssub.s32 2048, 2048
      %65 = vsyncadd [#allocation9], %s64
      %s66 = sshll.u32 [#allocation10], 4
      %s67 = int_to_ptr.vmem [resolvable:$true] %s66
      %72 = dma.hbm_to_vmem [thread:$0]  %s4, 2048, %s67, [#allocation9], 128, 128, 8
    $region21: #{tpu_custom_call.1} parent=1 // pred_fallthru
      _
    // Predicated region
    $region22: #{tpu_custom_call.1} parent=1 // pred_check
      _
    $region23: #{tpu_custom_call.1} parent=1 // pred_check_branch
      %74 = sbr.rel (0) target = $region25
    $region24: #{tpu_custom_call.1} parent=1 // pred_region
      %75 = dma.done [#allocation3], 128
    $region25: #{tpu_custom_call.1} parent=1 // pred_fallthru
      _
    // Predicated region
    $region26: #{tpu_custom_call.1} parent=1 // pred_check
      _
    $region27: #{tpu_custom_call.1} parent=1 // pred_check_branch
      %77 = sbr.rel (0) target = $region29
    $region28: #{tpu_custom_call.1} parent=1 // pred_region
      %78 = dma.done [#allocation6], 128
    $region29: #{tpu_custom_call.1} parent=1 // pred_fallthru
      _
    // Predicated region
    $region30: #{tpu_custom_call.1} parent=1 // pred_check
      _
    $region31: #{tpu_custom_call.1} parent=1 // pred_check_branch
      %80 = sbr.rel (0) target = $region33
    $region32: #{tpu_custom_call.1} parent=1 // pred_region
      %81 = dma.done [#allocation6], 256
    $region33: #{tpu_custom_call.1} parent=1 // pred_fallthru
      _
    // Predicated region
    $region34: #{tpu_custom_call.1} parent=1 // pred_check
      _
    $region35: #{tpu_custom_call.1} parent=1 // pred_check_branch
      %83 = sbr.rel (0) target = $region37
    $region36: #{tpu_custom_call.1} parent=1 // pred_region
      %84 = dma.done [#allocation9], 2048
    $region37: #{tpu_custom_call.1} parent=1 // pred_fallthru
      _
    // Predicated region
    $region38: #{tpu_custom_call.1} parent=1 // pred_check
      _
    $region39: #{tpu_custom_call.1} parent=1 // pred_check_branch
      %86 = sbr.rel (0) target = $region41
    $region40: #{tpu_custom_call.1} parent=1 // pred_region
      %87 = dma.done [#allocation9], 2048
    $region41: #{tpu_custom_call.1} parent=1 // pred_fallthru
      _
    %v88 = vld [vmem:[#allocation2] sm:$0xff]
    %v89 = vld [vmem:[#allocation7] sm:$0xff]
    %v90 = vld [vmem:[#allocation7 + $0x8] sm:$0xff]
    %v91 = vld [vmem:[#allocation5] sm:$0xff]
    %v92 = vld [vmem:[#allocation8] sm:$0xff]
    %v93 = vld [vmem:[#allocation8 + $0x8] sm:$0xff]
    %v94 = vld [vmem:[#allocation8 + $0x10] sm:$0xff]
    %v95 = vld [vmem:[#allocation8 + $0x18] sm:$0xff]
    %v96 = vld [vmem:[#allocation8 + $0x20] sm:$0xff]
    %v97 = vld [vmem:[#allocation8 + $0x28] sm:$0xff]
    %v98 = vld [vmem:[#allocation8 + $0x30] sm:$0xff]
    %v99 = vld [vmem:[#allocation8 + $0x38] sm:$0xff]
    %v100 = vld [vmem:[#allocation8 + $0x40] sm:$0xff]
    %v101 = vld [vmem:[#allocation8 + $0x48] sm:$0xff]
    %v102 = vld [vmem:[#allocation8 + $0x50] sm:$0xff]
    %v103 = vld [vmem:[#allocation8 + $0x58] sm:$0xff]
    %v104 = vld [vmem:[#allocation8 + $0x60] sm:$0xff]
    %v105 = vld [vmem:[#allocation8 + $0x68] sm:$0xff]
    %v106 = vld [vmem:[#allocation8 + $0x70] sm:$0xff]
    %v107 = vld [vmem:[#allocation8 + $0x78] sm:$0xff]
    %108 = vmatprep.subr.mxu0 0.0
    %109 = vmatpush1.msra.mxu0 %v107
    %110 = vmatprep.subr.mxu0 0.0
    %111 = vmatpush1.msra.mxu0 %v106
    %112 = vmatprep.subr.mxu0 0.0
    %113 = vmatpush1.msra.mxu0 %v105
    %114 = vmatprep.subr.mxu0 0.0
    %115 = vmatpush1.msra.mxu0 %v104
    %116 = vmatprep.subr.mxu0 0.0
    %117 = vmatpush1.msra.mxu0 %v103
    %118 = vmatprep.subr.mxu0 0.0
    %119 = vmatpush1.msra.mxu0 %v102
    %120 = vmatprep.subr.mxu0 0.0
    %121 = vmatpush1.msra.mxu0 %v101
    %122 = vmatprep.subr.mxu0 0.0
    %123 = vmatpush1.msra.mxu0 %v100
    %124 = vmatprep.subr.mxu0 0.0
    %125 = vmatpush1.msra.mxu0 %v99
    %126 = vmatprep.subr.mxu0 0.0
    %127 = vmatpush1.msra.mxu0 %v98
    %128 = vmatprep.subr.mxu0 0.0
    %129 = vmatpush1.msra.mxu0 %v97
    %130 = vmatprep.subr.mxu0 0.0
    %131 = vmatpush1.msra.mxu0 %v96
    %132 = vmatprep.subr.mxu0 0.0
    %133 = vmatpush1.msra.mxu0 %v95
    %134 = vmatprep.subr.mxu0 0.0
    %135 = vmatpush1.msra.mxu0 %v94
    %136 = vmatprep.subr.mxu0 0.0
    %137 = vmatpush1.msra.mxu0 %v93
    %138 = vmatprep.subr.mxu0 0.0
    %139 = vmatpush1.msra.mxu0 %v92
    %140 = vmatprep.subr.mxu0 0.0
    %141 = vmatpush2.msra.mxu0 0.0
    %142 = vmatprep.subr.mxu0 0.0
    %143 = vmatpush2.msra.mxu0 0.0
    %144 = vmatprep.subr.mxu0 0.0
    %145 = vmatpush2.msra.mxu0 0.0
    %146 = vmatprep.subr.mxu0 0.0
    %147 = vmatpush2.msra.mxu0 0.0
    %148 = vmatprep.subr.mxu0 0.0
    %149 = vmatpush2.msra.mxu0 0.0
    %150 = vmatprep.subr.mxu0 0.0
    %151 = vmatpush2.msra.mxu0 0.0
    %152 = vmatprep.subr.mxu0 0.0
    %153 = vmatpush2.msra.mxu0 0.0
    %154 = vmatprep.subr.mxu0 0.0
    %155 = vmatpush2.msra.mxu0 0.0
    %156 = vmatprep.subr.mxu0 0.0
    %157 = vmatpush2.msra.mxu0 0.0
    %158 = vmatprep.subr.mxu0 0.0
    %159 = vmatpush2.msra.mxu0 0.0
    %160 = vmatprep.subr.mxu0 0.0
    %161 = vmatpush2.msra.mxu0 0.0
    %162 = vmatprep.subr.mxu0 0.0
    %163 = vmatpush2.msra.mxu0 0.0
    %164 = vmatprep.subr.mxu0 0.0
    %165 = vmatpush2.msra.mxu0 0.0
    %166 = vmatprep.subr.mxu0 0.0
    %167 = vmatpush2.msra.mxu0 0.0
    %168 = vmatprep.subr.mxu0 0.0
    %169 = vmatpush2.msra.mxu0 0.0
    %170 = vmatprep.subr.mxu0 0.0
    %171 = vmatpush2.msra.mxu0 0.0
    %172 = vmatprep.mubr.f32.mxu0 0.0
    %173 = vmatmul.mubr.f32.gmra.mxu0 %v91
    %v174 = vpop.f32.mrf.mxu0
    %v175 = vadd.f32 0.0, %v174
    %v176 = vpop.f32.mrf.mxu0
    %177 = vdwg.mxu0
    %vm178 = vcmask 130048
    %v180 = vsel %vm178, %v88, 0
    %182 = vmatprep.subr.mxu0 0.0
    %183 = vmatpush1.msra.mxu0 0.0
    %184 = vmatprep.subr.mxu0 0.0
    %185 = vmatpush1.msra.mxu0 0.0
    %186 = vmatprep.subr.mxu0 0.0
    %187 = vmatpush1.msra.mxu0 0.0
    %188 = vmatprep.subr.mxu0 0.0
    %189 = vmatpush1.msra.mxu0 0.0
    %190 = vmatprep.subr.mxu0 0.0
    %191 = vmatpush1.msra.mxu0 0.0
    %192 = vmatprep.subr.mxu0 0.0
    %193 = vmatpush1.msra.mxu0 0.0
    %194 = vmatprep.subr.mxu0 0.0
    %195 = vmatpush1.msra.mxu0 0.0
    %196 = vmatprep.subr.mxu0 0.0
    %197 = vmatpush1.msra.mxu0 0.0
    %198 = vmatprep.subr.mxu0 0.0
    %199 = vmatpush1.msra.mxu0 0.0
    %200 = vmatprep.subr.mxu0 0.0
    %201 = vmatpush1.msra.mxu0 0.0
    %202 = vmatprep.subr.mxu0 0.0
    %203 = vmatpush1.msra.mxu0 0.0
    %204 = vmatprep.subr.mxu0 0.0
    %205 = vmatpush1.msra.mxu0 0.0
    %206 = vmatprep.subr.mxu0 0.0
    %207 = vmatpush1.msra.mxu0 0.0
    %208 = vmatprep.subr.mxu0 0.0
    %209 = vmatpush1.msra.mxu0 0.0
    %210 = vmatprep.subr.mxu0 0.0
    %211 = vmatpush1.msra.mxu0 %v90
    %212 = vmatprep.subr.mxu0 0.0
    %213 = vmatpush1.msra.mxu0 %v89
    %214 = vmatprep.subr.mxu0 0.0
    %215 = vmatpush2.msra.mxu0 0.0
    %216 = vmatprep.subr.mxu0 0.0
    %217 = vmatpush2.msra.mxu0 0.0
    %218 = vmatprep.subr.mxu0 0.0
    %219 = vmatpush2.msra.mxu0 0.0
    %220 = vmatprep.subr.mxu0 0.0
    %221 = vmatpush2.msra.mxu0 0.0
    %222 = vmatprep.subr.mxu0 0.0
    %223 = vmatpush2.msra.mxu0 0.0
    %224 = vmatprep.subr.mxu0 0.0
    %225 = vmatpush2.msra.mxu0 0.0
    %226 = vmatprep.subr.mxu0 0.0
    %227 = vmatpush2.msra.mxu0 0.0
    %228 = vmatprep.subr.mxu0 0.0
    %229 = vmatpush2.msra.mxu0 0.0
    %230 = vmatprep.subr.mxu0 0.0
    %231 = vmatpush2.msra.mxu0 0.0
    %232 = vmatprep.subr.mxu0 0.0
    %233 = vmatpush2.msra.mxu0 0.0
    %234 = vmatprep.subr.mxu0 0.0
    %235 = vmatpush2.msra.mxu0 0.0
    %236 = vmatprep.subr.mxu0 0.0
    %237 = vmatpush2.msra.mxu0 0.0
    %238 = vmatprep.subr.mxu0 0.0
    %239 = vmatpush2.msra.mxu0 0.0
    %240 = vmatprep.subr.mxu0 0.0
    %241 = vmatpush2.msra.mxu0 0.0
    %242 = vmatprep.subr.mxu0 0.0
    %243 = vmatpush2.msra.mxu0 0.0
    %244 = vmatprep.subr.mxu0 0.0
    %245 = vmatpush2.msra.mxu0 0.0
    %246 = vmatprep.mubr.f32.mxu0 0.0
    %247 = vmatmul.mubr.f32.gmra.mxu0 %v180
    %v248 = vpop.f32.mrf.mxu0
    %v249 = vadd.f32 %v175, %v248
    %v250 = vpop.f32.mrf.mxu0
    %251 = vdwg.mxu0
    %v252 = vtanh.pop %v249
    %253 = vst [vmem:[#allocation12] sm:$0xff] %v252
    %v254 = vld [vmem:[#allocation10] sm:$0xff]
    %v255 = vld [vmem:[#allocation10 + $0x8] sm:$0xff]
    %v256 = vld [vmem:[#allocation10 + $0x10] sm:$0xff]
    %v257 = vld [vmem:[#allocation10 + $0x18] sm:$0xff]
    %v258 = vld [vmem:[#allocation10 + $0x20] sm:$0xff]
    %v259 = vld [vmem:[#allocation10 + $0x28] sm:$0xff]
    %v260 = vld [vmem:[#allocation10 + $0x30] sm:$0xff]
    %v261 = vld [vmem:[#allocation10 + $0x38] sm:$0xff]
    %v262 = vld [vmem:[#allocation10 + $0x40] sm:$0xff]
    %v263 = vld [vmem:[#allocation10 + $0x48] sm:$0xff]
    %v264 = vld [vmem:[#allocation10 + $0x50] sm:$0xff]
    %v265 = vld [vmem:[#allocation10 + $0x58] sm:$0xff]
    %v266 = vld [vmem:[#allocation10 + $0x60] sm:$0xff]
    %v267 = vld [vmem:[#allocation10 + $0x68] sm:$0xff]
    %v268 = vld [vmem:[#allocation10 + $0x70] sm:$0xff]
    %v269 = vld [vmem:[#allocation10 + $0x78] sm:$0xff]
    %270 = vmatprep.subr.mxu0 0.0
    %271 = vmatpush1.msra.mxu0 %v269
    %272 = vmatprep.subr.mxu0 0.0
    %273 = vmatpush1.msra.mxu0 %v268
    %274 = vmatprep.subr.mxu0 0.0
    %275 = vmatpush1.msra.mxu0 %v267
    %276 = vmatprep.subr.mxu0 0.0
    %277 = vmatpush1.msra.mxu0 %v266
    %278 = vmatprep.subr.mxu0 0.0
    %279 = vmatpush1.msra.mxu0 %v265
    %280 = vmatprep.subr.mxu0 0.0
    %281 = vmatpush1.msra.mxu0 %v264
    %282 = vmatprep.subr.mxu0 0.0
    %283 = vmatpush1.msra.mxu0 %v263
    %284 = vmatprep.subr.mxu0 0.0
    %285 = vmatpush1.msra.mxu0 %v262
    %286 = vmatprep.subr.mxu0 0.0
    %287 = vmatpush1.msra.mxu0 %v261
    %288 = vmatprep.subr.mxu0 0.0
    %289 = vmatpush1.msra.mxu0 %v260
    %290 = vmatprep.subr.mxu0 0.0
    %291 = vmatpush1.msra.mxu0 %v259
    %292 = vmatprep.subr.mxu0 0.0
    %293 = vmatpush1.msra.mxu0 %v258
    %294 = vmatprep.subr.mxu0 0.0
    %295 = vmatpush1.msra.mxu0 %v257
    %296 = vmatprep.subr.mxu0 0.0
    %297 = vmatpush1.msra.mxu0 %v256
    %298 = vmatprep.subr.mxu0 0.0
    %299 = vmatpush1.msra.mxu0 %v255
    %300 = vmatprep.subr.mxu0 0.0
    %301 = vmatpush1.msra.mxu0 %v254
    %302 = vmatprep.subr.mxu0 0.0
    %303 = vmatpush2.msra.mxu0 0.0
    %304 = vmatprep.subr.mxu0 0.0
    %305 = vmatpush2.msra.mxu0 0.0
    %306 = vmatprep.subr.mxu0 0.0
    %307 = vmatpush2.msra.mxu0 0.0
    %308 = vmatprep.subr.mxu0 0.0
    %309 = vmatpush2.msra.mxu0 0.0
    %310 = vmatprep.subr.mxu0 0.0
    %311 = vmatpush2.msra.mxu0 0.0
    %312 = vmatprep.subr.mxu0 0.0
    %313 = vmatpush2.msra.mxu0 0.0
    %314 = vmatprep.subr.mxu0 0.0
    %315 = vmatpush2.msra.mxu0 0.0
    %316 = vmatprep.subr.mxu0 0.0
    %317 = vmatpush2.msra.mxu0 0.0
    %318 = vmatprep.subr.mxu0 0.0
    %319 = vmatpush2.msra.mxu0 0.0
    %320 = vmatprep.subr.mxu0 0.0
    %321 = vmatpush2.msra.mxu0 0.0
    %322 = vmatprep.subr.mxu0 0.0
    %323 = vmatpush2.msra.mxu0 0.0
    %324 = vmatprep.subr.mxu0 0.0
    %325 = vmatpush2.msra.mxu0 0.0
    %326 = vmatprep.subr.mxu0 0.0
    %327 = vmatpush2.msra.mxu0 0.0
    %328 = vmatprep.subr.mxu0 0.0
    %329 = vmatpush2.msra.mxu0 0.0
    %330 = vmatprep.subr.mxu0 0.0
    %331 = vmatpush2.msra.mxu0 0.0
    %332 = vmatprep.subr.mxu0 0.0
    %333 = vmatpush2.msra.mxu0 0.0
    %334 = vmatprep.mubr.f32.mxu0 0.0
    %335 = vmatmul.mubr.f32.gmra.mxu0 %v252
    %v336 = vpop.f32.mrf.mxu0
    %v337 = vadd.f32 0.0, %v336
    %v338 = vpop.f32.mrf.mxu0
    %339 = vdwg.mxu0
    %340 = vst [vmem:[#allocation11] sm:$0xff] %v337
    // Predicated region
    $region42: #{tpu_custom_call.1} parent=1 // pred_check
      _
    $region43: #{tpu_custom_call.1} parent=1 // pred_check_branch
      %342 = sbr.rel (0) target = $region45
    $region44: #{tpu_custom_call.1} parent=1 // pred_region
      %s344 = ssub.s32 128, 128
      %345 = vsyncadd [#allocation4], %s344
      %s347 = sshll.u32 [#allocation11], 4
      %s348 = int_to_ptr.vmem [resolvable:$true] %s347
      %350 = dma.vmem_to_hbm [thread:$0]  %s348, 128, %s5, [#allocation4]
    $region45: #{tpu_custom_call.1} parent=1 // pred_fallthru
      _
    // Predicated region
    $region46: #{tpu_custom_call.1} parent=1 // pred_check
      _
    $region47: #{tpu_custom_call.1} parent=1 // pred_check_branch
      %352 = sbr.rel (0) target = $region49
    $region48: #{tpu_custom_call.1} parent=1 // pred_region
      %s354 = ssub.s32 128, 128
      %355 = vsyncadd [#allocation13], %s354
      %s357 = sshll.u32 [#allocation12], 4
      %s358 = int_to_ptr.vmem [resolvable:$true] %s357
      %360 = dma.vmem_to_hbm [thread:$0]  %s358, 128, %s6, [#allocation13]
    $region49: #{tpu_custom_call.1} parent=1 // pred_fallthru
      _
    // Predicated region
    $region50: #{tpu_custom_call.1} parent=1 // pred_check
      _
    $region51: #{tpu_custom_call.1} parent=1 // pred_check_branch
      %362 = sbr.rel (0) target = $region53
    $region52: #{tpu_custom_call.1} parent=1 // pred_region
      %363 = dma.done [#allocation4], 128
    $region53: #{tpu_custom_call.1} parent=1 // pred_fallthru
      _
    // Predicated region
    $region54: #{tpu_custom_call.1} parent=1 // pred_check
      _
    $region55: #{tpu_custom_call.1} parent=1 // pred_check_branch
      %365 = sbr.rel (0) target = $region57
    $region56: #{tpu_custom_call.1} parent=1 // pred_region
      %366 = dma.done [#allocation13], 128
    $region57: #{tpu_custom_call.1} parent=1 // pred_fallthru
      _
    %367 = vsyncpa [#allocation3], 1
    %368 = vsyncpa [#allocation6], 1
    %369 = vsyncpa [#allocation9], 1
    %370 = vsyncpa [#allocation4], 1
    %371 = vsyncpa [#allocation13], 1

</llo_original>
